<compile_context>
chip_gen: v6e
topology: v6e:2x2x1
jax: 0.10.0
libtpu: 0.0.40
codegen_flags: <defaults>
</compile_context>

<pallas_src>
import functools

import jax
import jax.numpy as jnp
from jax.experimental import pallas as pl
from jax.experimental.pallas import tpu as pltpu


def _find_multiple(n: int, k: int) -> int:
    if n % k == 0:
        return n
    return n + k - n % k


def _tpu_params():
    """Per-TensorCore VMEM capacity + a 2-TC-per-chip heuristic (v7x)."""
    cap = 64 << 20  # conservative fallback: compiles everywhere
    try:
        cap = int(pltpu.get_tpu_info().vmem_capacity_bytes)
    except Exception:
        pass
    two_cores = cap <= (64 << 20)  # only v7x has 64 MiB VMEM (and 2 TCs/chip)
    return cap, two_cores


def _default_tiles(vmem_cap):
    if vmem_cap <= (64 << 20):   # v7x: keep resident tiles well under 64 MiB
        return 512, 256
    return 768, 512              # v5e / v6e: 128 MiB VMEM


def _pick_tf(F, tf_req):
    """Largest multiple of 128 that divides F and is <= tf_req."""
    tf = max(128, min(tf_req, F))
    tf = (tf // 128) * 128
    while tf > 128 and F % tf != 0:
        tf -= 128
    return tf


def pack_ffn_weights(w1, w3, w2, dtype=jnp.bfloat16):
    """One-time weight repack (call at weight-load time, NOT per forward).

    w1, w3: (F, D) PyTorch nn.Linear(dim, intermediate).weight
    w2    : (D, F) PyTorch nn.Linear(intermediate, dim).weight
    Returns (w1_t, w3_t, w2_t) = ((D, F), (D, F), (F, D)) in `dtype`.
    """
    return (jnp.asarray(w1).T.astype(dtype),
            jnp.asarray(w3).T.astype(dtype),
            jnp.asarray(w2).T.astype(dtype))


def ffn_kernel(x_ref, w1_ref, w3_ref, w2_ref, o_ref, acc_ref):
    """One (token-tile, intermediate-tile) step of the SwiGLU FFN.

    Grid axis 0: token tiles ("parallel").
    Grid axis 1: intermediate-size tiles (reduction for the down-projection).
    """
    j = pl.program_id(1)

    @pl.when(j == 0)
    def _():
        acc_ref[...] = jnp.zeros_like(acc_ref)

    x = x_ref[...]                                          # (tm, D) bf16
    h1 = jnp.dot(x, w1_ref[...], preferred_element_type=jnp.float32)  # (tm, tf)
    h3 = jnp.dot(x, w3_ref[...], preferred_element_type=jnp.float32)  # (tm, tf)
    h = (h1 * jax.nn.sigmoid(h1)) * h3                      # silu(h1) * h3, f32

    # Partial down-projection, accumulated over the intermediate axis in f32.
    acc_ref[...] += jnp.dot(h.astype(w2_ref.dtype), w2_ref[...],
                            preferred_element_type=jnp.float32)        # (tm, D)

    @pl.when(j == pl.num_programs(1) - 1)
    def _():
        o_ref[...] = acc_ref[...].astype(o_ref.dtype)


@functools.partial(jax.jit,
                   static_argnames=("tm", "tf", "two_cores", "vmem_cap"))
def _feed_forward_impl(x, w1_t, w3_t, w2_t, *, tm, tf, two_cores, vmem_cap):
    orig_shape = x.shape
    out_dtype = x.dtype
    D = orig_shape[-1]
    F = w1_t.shape[1]
    assert w1_t.shape == (D, F) and w3_t.shape == (D, F) and w2_t.shape == (F, D)
    assert D % 128 == 0, "model dim must be a multiple of 128"
    assert F % 128 == 0, "intermediate size must be a multiple of 128"

    tf_eff = _pick_tf(F, tf)

    # ---- flatten + pad tokens ----
    x2d = x.reshape(-1, D)
    T = x2d.shape[0]
    if T <= tm:
        if two_cores and T > 2 * 128:
            # v7x: keep both TensorCores busy -> at least 2 token tiles.
            T_pad = _find_multiple(T, 32)
            tm_eff = T_pad // 2
        else:
            # decode-sized: pad only to bf16 sublane packing (16), not 128
            T_pad = _find_multiple(T, 16)
            tm_eff = T_pad
    else:
        tm_eff = tm                               # multiple of 128 (MXU-shaped)
        T_pad = _find_multiple(T, tm_eff)
    if T_pad != T:
        x2d = jnp.pad(x2d, ((0, T_pad - T), (0, 0)))

    x_bf = x2d.astype(jnp.bfloat16)

    grid = (T_pad // tm_eff, F // tf_eff)

    # ---- VMEM budget from the actual tiles, capped to this chip's capacity ----
    bf16_b = 2
    out_b = jnp.dtype(out_dtype).itemsize
    vmem_bytes = (
        2 * tm_eff * D * bf16_b          # x tile (double-buffered)
        + 2 * 2 * D * tf_eff * bf16_b    # w1 + w3 tiles
        + 2 * tf_eff * D * bf16_b        # w2 tile
        + 2 * tm_eff * D * out_b         # output tile
        + tm_eff * D * 4                 # f32 accumulator
    )
    vmem_limit = int(vmem_bytes * 1.25) + (4 << 20)
    vmem_limit = min(vmem_limit, vmem_cap - (8 << 20))   # headroom, never > phys
    vmem_limit = max(vmem_limit, 32 << 20)

    out = pl.pallas_call(
        ffn_kernel,
        out_shape=jax.ShapeDtypeStruct((T_pad, D), out_dtype),
        grid_spec=pltpu.PrefetchScalarGridSpec(
            num_scalar_prefetch=0,
            grid=grid,
            in_specs=[
                pl.BlockSpec((tm_eff, D), lambda i, j: (i, 0)),    # x tile
                pl.BlockSpec((D, tf_eff), lambda i, j: (0, j)),    # W1^T tile
                pl.BlockSpec((D, tf_eff), lambda i, j: (0, j)),    # W3^T tile
                pl.BlockSpec((tf_eff, D), lambda i, j: (j, 0)),    # W2^T tile
            ],
            out_specs=pl.BlockSpec((tm_eff, D), lambda i, j: (i, 0)),
            scratch_shapes=[pltpu.VMEM((tm_eff, D), jnp.float32)],
        ),
        compiler_params=pltpu.CompilerParams(
            dimension_semantics=("parallel", "arbitrary"),
            vmem_limit_bytes=vmem_limit,
        ),
    )(x_bf, w1_t, w3_t, w2_t)

    return out[:T].reshape(orig_shape)


def feed_forward(x, w1_t, w3_t, w2_t, *, tm=None, tf=None):
    """SwiGLU FFN forward on pre-packed weights (see pack_ffn_weights).

    x    : (..., D) activations (any float dtype; output keeps x.dtype).
    w1_t : (D, F) bf16, w3_t: (D, F) bf16, w2_t: (F, D) bf16.
    """
    vmem_cap, two_cores = _tpu_params()
    tm_def, tf_def = _default_tiles(vmem_cap)
    tm = tm_def if tm is None else tm
    tf = tf_def if tf is None else tf
    return _feed_forward_impl(x, w1_t, w3_t, w2_t, tm=tm, tf=tf,
                              two_cores=two_cores, vmem_cap=vmem_cap)


def feed_forward_ref(x, w1, w3, w2):
    """f32 reference matching the PyTorch module semantics."""
    h1 = x @ w1.T
    h3 = x @ w3.T
    return (jax.nn.silu(h1) * h3) @ w2.T


if __name__ == "__main__":
    # Small ModelArgs-consistent shapes:
    #   dim = 256  ->  intermediate_size = find_multiple(int(2*4*256/3), 256) = 768
    batch, seq, dim = 2, 8, 256
    intermediate = _find_multiple(int(2 * 4 * dim / 3), 256)  # 768

    key = jax.random.PRNGKey(0)
    kx, k1, k2, k3 = jax.random.split(key, 4)

    # PyTorch nn.Linear weight layouts: w1/w3 -> (intermediate, dim), w2 -> (dim, intermediate)
    x = jax.random.normal(kx, (batch, seq, dim), dtype=jnp.float32)
    w1 = jax.random.normal(k1, (intermediate, dim), dtype=jnp.float32) * 0.02
    w3 = jax.random.normal(k3, (intermediate, dim), dtype=jnp.float32) * 0.02
    w2 = jax.random.normal(k2, (dim, intermediate), dtype=jnp.float32) * 0.02

    # One-time weight packing (load-time, outside the per-call jit).
    w1_t, w3_t, w2_t = pack_ffn_weights(w1, w3, w2)

    out = feed_forward(x, w1_t, w3_t, w2_t)        # Pallas kernel (bf16 MXU, f32 acc)
    jax.block_until_ready(out)

    ref = feed_forward_ref(x, w1, w3, w2)
    # bf16 operand feeds vs. all-f32 reference -> bf16-appropriate tolerances.
    assert jnp.allclose(out, ref, atol=2e-2, rtol=2e-2), (
        f"mismatch vs. reference, max abs err = {jnp.max(jnp.abs(out - ref))}"
    )

    print("KERNEL_OK")
</pallas_src>

<mosaic_0001>
module attributes {stable_mosaic.version = 11 : i64} {
  func.func @ffn_kernel(%arg0: i32, %arg1: i32, %arg2: memref<16x256xbf16, #tpu.memory_space<vmem>>, %arg3: memref<256x256xbf16, #tpu.memory_space<vmem>>, %arg4: memref<256x256xbf16, #tpu.memory_space<vmem>>, %arg5: memref<256x256xbf16, #tpu.memory_space<vmem>>, %arg6: memref<16x256xf32, #tpu.memory_space<vmem>>, %arg7: memref<16x256xf32, #tpu.memory_space<vmem>>) attributes {dimension_semantics = [#tpu.dimension_semantics<parallel>, #tpu.dimension_semantics<arbitrary>], iteration_bounds = array<i64: 1, 3>, scalar_prefetch = 0 : i64, scratch_operands = 1 : i64, tpu.core_type = #tpu.core_type<tc>, window_params = [{transform_indices = @transform_0, window_bounds = array<i64: 16, 256>}, {transform_indices = @transform_1, window_bounds = array<i64: 256, 256>}, {transform_indices = @transform_2, window_bounds = array<i64: 256, 256>}, {transform_indices = @transform_3, window_bounds = array<i64: 256, 256>}, {transform_indices = @transform_4, window_bounds = array<i64: 16, 256>}]} {
    %c0_i32 = arith.constant 0 : i32
    %0 = arith.cmpi eq, %arg1, %c0_i32 : i32
    %1 = arith.extui %0 : i1 to i32
    %c0_i32_0 = arith.constant 0 : i32
    %2 = arith.cmpi ne, %1, %c0_i32_0 : i32
    scf.if %2 {
      %cst_16 = arith.constant 0.000000e+00 : f32
      %24 = vector.broadcast %cst_16 : f32 to vector<16x256xf32>
      %c0_17 = arith.constant 0 : index
      %c0_18 = arith.constant 0 : index
      %25 = vector.load %arg7[%c0_17, %c0_18] : memref<16x256xf32, #tpu.memory_space<vmem>>, vector<16x256xf32>
      tpu.vector_store %arg7[%c0_17, %c0_18], %24 {strides = array<i32>} : memref<16x256xf32, #tpu.memory_space<vmem>>, vector<16x256xf32>,
    } else {
    }
    %c0 = arith.constant 0 : index
    %c0_1 = arith.constant 0 : index
    %3 = vector.load %arg2[%c0, %c0_1] : memref<16x256xbf16, #tpu.memory_space<vmem>>, vector<16x256xbf16>
    %c0_2 = arith.constant 0 : index
    %c0_3 = arith.constant 0 : index
    %4 = vector.load %arg3[%c0_2, %c0_3] : memref<256x256xbf16, #tpu.memory_space<vmem>>, vector<256x256xbf16>
    %cst = arith.constant dense<0.000000e+00> : vector<16x256xf32>
    %5 = tpu.matmul %3, %4, %cst {dimension_numbers = #tpu.dot_dimension_numbers<[1], [0], [0], [1], [0, 0, 1, 1], [], []>} : vector<16x256xbf16>, vector<256x256xbf16>, vector<16x256xf32> -> vector<16x256xf32>
    %c0_4 = arith.constant 0 : index
    %c0_5 = arith.constant 0 : index
    %6 = vector.load %arg4[%c0_4, %c0_5] : memref<256x256xbf16, #tpu.memory_space<vmem>>, vector<256x256xbf16>
    %cst_6 = arith.constant dense<0.000000e+00> : vector<16x256xf32>
    %7 = tpu.matmul %3, %6, %cst_6 {dimension_numbers = #tpu.dot_dimension_numbers<[1], [0], [0], [1], [0, 0, 1, 1], [], []>} : vector<16x256xbf16>, vector<256x256xbf16>, vector<16x256xf32> -> vector<16x256xf32>
    %8 = arith.negf %5 : vector<16x256xf32>
    %9 = math.exp %8 : vector<16x256xf32>
    %cst_7 = arith.constant 1.000000e+00 : f32
    %10 = vector.broadcast %cst_7 : f32 to vector<16x256xf32>
    %11 = arith.addf %10, %9 : vector<16x256xf32>
    %12 = arith.divf %10, %11 : vector<16x256xf32>
    %13 = arith.mulf %5, %12 : vector<16x256xf32>
    %14 = arith.mulf %13, %7 : vector<16x256xf32>
    %c0_8 = arith.constant 0 : index
    %c0_9 = arith.constant 0 : index
    %15 = vector.load %arg7[%c0_8, %c0_9] : memref<16x256xf32, #tpu.memory_space<vmem>>, vector<16x256xf32>
    %16 = arith.truncf %14 : vector<16x256xf32> to vector<16x256xbf16>
    %c0_10 = arith.constant 0 : index
    %c0_11 = arith.constant 0 : index
    %17 = vector.load %arg5[%c0_10, %c0_11] : memref<256x256xbf16, #tpu.memory_space<vmem>>, vector<256x256xbf16>
    %cst_12 = arith.constant dense<0.000000e+00> : vector<16x256xf32>
    %18 = tpu.matmul %16, %17, %cst_12 {dimension_numbers = #tpu.dot_dimension_numbers<[1], [0], [0], [1], [0, 0, 1, 1], [], []>} : vector<16x256xbf16>, vector<256x256xbf16>, vector<16x256xf32> -> vector<16x256xf32>
    %19 = arith.addf %15, %18 : vector<16x256xf32>
    %c0_13 = arith.constant 0 : index
    %c0_14 = arith.constant 0 : index
    %20 = vector.load %arg7[%c0_13, %c0_14] : memref<16x256xf32, #tpu.memory_space<vmem>>, vector<16x256xf32>
    tpu.vector_store %arg7[%c0_13, %c0_14], %19 {strides = array<i32>} : memref<16x256xf32, #tpu.memory_space<vmem>>, vector<16x256xf32>,
    %c2_i32 = arith.constant 2 : i32
    %21 = arith.cmpi eq, %arg1, %c2_i32 : i32
    %22 = arith.extui %21 : i1 to i32
    %c0_i32_15 = arith.constant 0 : i32
    %23 = arith.cmpi ne, %22, %c0_i32_15 : i32
    scf.if %23 {
      %c0_16 = arith.constant 0 : index
      %c0_17 = arith.constant 0 : index
      %24 = vector.load %arg7[%c0_16, %c0_17] : memref<16x256xf32, #tpu.memory_space<vmem>>, vector<16x256xf32>
      %c0_18 = arith.constant 0 : index
      %c0_19 = arith.constant 0 : index
      %25 = vector.load %arg6[%c0_18, %c0_19] : memref<16x256xf32, #tpu.memory_space<vmem>>, vector<16x256xf32>
      tpu.vector_store %arg6[%c0_18, %c0_19], %24 {strides = array<i32>} : memref<16x256xf32, #tpu.memory_space<vmem>>, vector<16x256xf32>,
    } else {
    }
    return
  }
  func.func @transform_0(%arg0: i32, %arg1: i32) -> (i32, i32) {
    %c0_i32 = arith.constant 0 : i32
    %c0_i32_0 = arith.constant 0 : i32
    return %arg0, %c0_i32 : i32, i32
  }
  func.func @transform_1(%arg0: i32, %arg1: i32) -> (i32, i32) {
    %c0_i32 = arith.constant 0 : i32
    %c0_i32_0 = arith.constant 0 : i32
    return %c0_i32, %arg1 : i32, i32
  }
  func.func @transform_2(%arg0: i32, %arg1: i32) -> (i32, i32) {
    %c0_i32 = arith.constant 0 : i32
    %c0_i32_0 = arith.constant 0 : i32
    return %c0_i32, %arg1 : i32, i32
  }
  func.func @transform_3(%arg0: i32, %arg1: i32) -> (i32, i32) {
    %c0_i32 = arith.constant 0 : i32
    %c0_i32_0 = arith.constant 0 : i32
    return %arg1, %c0_i32 : i32, i32
  }
  func.func @transform_4(%arg0: i32, %arg1: i32) -> (i32, i32) {
    %c0_i32 = arith.constant 0 : i32
    %c0_i32_0 = arith.constant 0 : i32
    return %arg0, %c0_i32 : i32, i32
  }
}

</mosaic_0001>

<llo_original>
// kernel: _feed_forward_impl.1
$region0: #{_feed_forward_impl.1}
  #allocation0 [shape = 'u32[]', space=smem, size = 0x4, offset = 0x4, fixed_abs, tag = 'smem constant byte address 0x4 - core index']
  #allocation1 [shape = 'u32[144,128]{1,0:T(1,128)}', space=vmem, size = 0x12000, scoped, tag = 'internal scratch']
  #allocation2 [shape = 'f32[16,256]{1,0:T(8,128)}', space=vmem, size = 0x4000, scoped, tag = 'scratch operand']
  %s0 = inlined_call_operand.vmem [shape: bf16[16,256], index: 0, kind: input, shape index: {}]
  %s1 = inlined_call_operand.hbm [shape: bf16[256,768], index: 1, kind: input, shape index: {}]
  %s2 = inlined_call_operand.hbm [shape: bf16[256,768], index: 2, kind: input, shape index: {}]
  %s3 = inlined_call_operand.hbm [shape: bf16[768,256], index: 3, kind: input, shape index: {}]
  %s4 = inlined_call_operand.hbm [shape: f32[16,256], index: 4, kind: output, shape index: {}]
  %s5 = sld [smem:[#allocation0]]
  $region69: #{_feed_forward_impl.1} parent=0
    _
  %s7 = ssub.s32 1, %s5
  %s8 = scalar_select 0, %s7, %s5
  $region1: #{_feed_forward_impl.1} parent=0
    #allocation3 [shape = 'u8[262144]{0}', space=vmem, size = 0x40000, scoped, tag = 'input window, operand 1']
    #allocation4 [shape = 's32[2]{0}', space=sflag, size = 0x8, scoped, tag = 'scoped memory for _feed_forward_impl.1']
    #allocation5 [shape = 's32[2]{0}', space=sflag, size = 0x8, scoped, tag = 'scoped memory for _feed_forward_impl.1']
    #allocation6 [shape = 'u8[262144]{0}', space=vmem, size = 0x40000, scoped, tag = 'input window, operand 2']
    #allocation7 [shape = 's32[2]{0}', space=sflag, size = 0x8, scoped, tag = 'scoped memory for _feed_forward_impl.1']
    #allocation8 [shape = 'u8[262144]{0}', space=vmem, size = 0x40000, scoped, tag = 'input window, operand 3']
    #allocation9 [shape = 'u8[16384]{0}', space=vmem, size = 0x4000, scoped, tag = 'output window, operand 0, single buffered']
    %9 = vsyncpa [#allocation4], 0
    %s10 = scalar_lea.sflag [#allocation4], 1
    %11 = vsyncpa %s10, 0
    %12 = vsyncpa [#allocation7], 0
    %s13 = scalar_lea.sflag [#allocation7], 1
    %14 = vsyncpa %s13, 0
    %15 = vsyncpa [#allocation5], 0
    loop: start=0, step=1, limit=5
    $region2: #{_feed_forward_impl.1} parent=1 // loop_pre_header
      _
    $region3: #{_feed_forward_impl.1} parent=1 // loop_header
      %s17 = sphi 0, %s21
      %p18 = scmp.ge.s32.totalorder %s17, 5
      %s24 = sphi 0, %s36
      %s25 = sphi 0, %s32
      %s26 = sphi 0, %s24
      %s27 = sphi 0, %s25
      %s28 = sphi 0, %s26
      %s29 = sphi 0, %s27
      %s39 = sphi 0, %s41
      %s42 = sphi 0, %s39
      %s43 = sphi 0, %s42
      %s59 = sphi 0, %s43
      %s65 = sphi 0, %s67
      %s68 = sphi 0, %s65
      %s69 = sphi 0, %s68
      %s85 = sphi 0, %s69
      %s91 = sphi 0, %s93
      %s94 = sphi 0, %s91
      %s95 = sphi 0, %s94
      %s111 = sphi 0, %s95
      %s117 = sphi 0, %s119
      %s120 = sphi 0, %s117
      %s121 = sphi 0, %s120
      %s137 = sphi 0, %s121
      %s143 = sphi 0, %s145
      %s146 = sphi 0, %s143
      %s147 = sphi 0, %s146
      %s163 = sphi 0, %s147
    $region4: #{_feed_forward_impl.1} parent=1 // loop_header_branch
      %20 = sbr.rel (%p18) target = $region8
    $region5: #{_feed_forward_impl.1} parent=1 // loop_body
      %s22 = ssub.s32 %s17, 1
      %s23 = ssub.s32 %s17, 2
      %s30 = sadd.s32 1, %s25
      %p31 = scmp.ge.s32.totalorder %s30, 3
      %s32 = scalar_select %p31, 0, %s30
      %s33 = sadd.s32 1, %s24
      %s34 = scalar_select %p31, %s33, %s24
      %p35 = scmp.ge.s32.totalorder %s34, 1
      %s36 = scalar_select %p35, 0, %s34
      %s37 = ssub.s32 %s24, %s36
      %p38 = scmp.eq.s32.totalorder %s37, 0
      %s40 = sadd.s32 %s39, 1
      %s41 = scalar_select %p38, %s39, %s40
      %p44 = pneg %p38
      %p45 = scmp.eq.s32.totalorder %s17, 2
      %p46 = por %p44, %p45
      %p47 = scmp.ne.s32.totalorder %s39, %s42
      %p48 = scmp.eq.s32.totalorder %s17, 0
      %p49 = por %p47, %p48
      %p50 = scmp.ne.s32.totalorder %s39, %s42
      %p51 = scmp.eq.s32.totalorder %s22, 2
      %p52 = por %p50, %p51
      %p53 = scmp.ne.s32.totalorder %s42, %s43
      %p54 = scmp.eq.s32.totalorder %s22, 0
      %p55 = por %p53, %p54
      %p56 = scmp.ne.s32.totalorder %s42, %s43
      %p57 = scmp.eq.s32.totalorder %s23, 2
      %p58 = por %p56, %p57
      %p60 = scmp.ne.s32.totalorder %s43, %s59
      %p61 = scmp.eq.s32.totalorder %s23, 0
      %p62 = por %p60, %p61
      %s63 = ssub.s32 %s25, %s32
      %p64 = scmp.eq.s32.totalorder %s63, 0
      %s66 = sadd.s32 %s65, 1
      %s67 = scalar_select %p64, %s65, %s66
      %p70 = pneg %p64
      %p71 = scmp.eq.s32.totalorder %s17, 2
      %p72 = por %p70, %p71
      %p73 = scmp.ne.s32.totalorder %s65, %s68
      %p74 = scmp.eq.s32.totalorder %s17, 0
      %p75 = por %p73, %p74
      %p76 = scmp.ne.s32.totalorder %s65, %s68
      %p77 = scmp.eq.s32.totalorder %s22, 2
      %p78 = por %p76, %p77
      %p79 = scmp.ne.s32.totalorder %s68, %s69
      %p80 = scmp.eq.s32.totalorder %s22, 0
      %p81 = por %p79, %p80
      %p82 = scmp.ne.s32.totalorder %s68, %s69
      %p83 = scmp.eq.s32.totalorder %s23, 2
      %p84 = por %p82, %p83
      %p86 = scmp.ne.s32.totalorder %s69, %s85
      %p87 = scmp.eq.s32.totalorder %s23, 0
      %p88 = por %p86, %p87
      %s89 = ssub.s32 %s25, %s32
      %p90 = scmp.eq.s32.totalorder %s89, 0
      %s92 = sadd.s32 %s91, 1
      %s93 = scalar_select %p90, %s91, %s92
      %p96 = pneg %p90
      %p97 = scmp.eq.s32.totalorder %s17, 2
      %p98 = por %p96, %p97
      %p99 = scmp.ne.s32.totalorder %s91, %s94
      %p100 = scmp.eq.s32.totalorder %s17, 0
      %p101 = por %p99, %p100
      %p102 = scmp.ne.s32.totalorder %s91, %s94
      %p103 = scmp.eq.s32.totalorder %s22, 2
      %p104 = por %p102, %p103
      %p105 = scmp.ne.s32.totalorder %s94, %s95
      %p106 = scmp.eq.s32.totalorder %s22, 0
      %p107 = por %p105, %p106
      %p108 = scmp.ne.s32.totalorder %s94, %s95
      %p109 = scmp.eq.s32.totalorder %s23, 2
      %p110 = por %p108, %p109
      %p112 = scmp.ne.s32.totalorder %s95, %s111
      %p113 = scmp.eq.s32.totalorder %s23, 0
      %p114 = por %p112, %p113
      %s115 = ssub.s32 %s25, %s32
      %p116 = scmp.eq.s32.totalorder %s115, 0
      %s118 = sadd.s32 %s117, 1
      %s119 = scalar_select %p116, %s117, %s118
      %p122 = pneg %p116
      %p123 = scmp.eq.s32.totalorder %s17, 2
      %p124 = por %p122, %p123
      %p125 = scmp.ne.s32.totalorder %s117, %s120
      %p126 = scmp.eq.s32.totalorder %s17, 0
      %p127 = por %p125, %p126
      %p128 = scmp.ne.s32.totalorder %s117, %s120
      %p129 = scmp.eq.s32.totalorder %s22, 2
      %p130 = por %p128, %p129
      %p131 = scmp.ne.s32.totalorder %s120, %s121
      %p132 = scmp.eq.s32.totalorder %s22, 0
      %p133 = por %p131, %p132
      %p134 = scmp.ne.s32.totalorder %s120, %s121
      %p135 = scmp.eq.s32.totalorder %s23, 2
      %p136 = por %p134, %p135
      %p138 = scmp.ne.s32.totalorder %s121, %s137
      %p139 = scmp.eq.s32.totalorder %s23, 0
      %p140 = por %p138, %p139
      %s141 = ssub.s32 %s24, %s36
      %p142 = scmp.eq.s32.totalorder %s141, 0
      %s144 = sadd.s32 %s143, 1
      %s145 = scalar_select %p142, %s143, %s144
      %p148 = pneg %p142
      %p149 = scmp.eq.s32.totalorder %s17, 2
      %p150 = por %p148, %p149
      %p151 = scmp.ne.s32.totalorder %s143, %s146
      %p152 = scmp.eq.s32.totalorder %s17, 0
      %p153 = por %p151, %p152
      %p154 = scmp.ne.s32.totalorder %s143, %s146
      %p155 = scmp.eq.s32.totalorder %s22, 2
      %p156 = por %p154, %p155
      %p157 = scmp.ne.s32.totalorder %s146, %s147
      %p158 = scmp.eq.s32.totalorder %s22, 0
      %p159 = por %p157, %p158
      %p160 = scmp.ne.s32.totalorder %s146, %s147
      %p161 = scmp.eq.s32.totalorder %s23, 2
      %p162 = por %p160, %p161
      %p164 = scmp.ne.s32.totalorder %s147, %s163
      %p165 = scmp.eq.s32.totalorder %s23, 0
      %p166 = por %p164, %p165
      %p167 = scmp.le.s32.totalorder 1, %s17
      %p168 = scmp.lt.s32.totalorder %s17, 4
      %p169 = pnand %p167, %p168
      %p170 = pneg %p169
      // Predicated region
      $region9: #{_feed_forward_impl.1} parent=5 // pred_check
        _
      $region10: #{_feed_forward_impl.1} parent=5 // pred_check_branch
        %172 = sbr.rel (%p169) target = $region12
      $region11: #{_feed_forward_impl.1} parent=5 // pred_region
        %s173 = ssub.s32 %s17, 1
        // Predicated region
        $region13: #{_feed_forward_impl.1} parent=11 // pred_check
          %p174 = pneg %p55
        $region14: #{_feed_forward_impl.1} parent=11 // pred_check_branch
          %176 = sbr.rel (%p174) target = $region16
        $region15: #{_feed_forward_impl.1} parent=11 // pred_region
          %s177 = smul.u32 2, %s26
          %p178 = scmp.lt.s32.totalorder %s177, 1
          %s179 = scalar_select %p178, %s177, 1
          %s180 = smul.addr %s179, 2
          %s181 = smul.addr %s180, 4
          %s182 = scalar_lea.vmem %s0, %s181
          %s183 = smul.u32 2, %s26
        $region16: #{_feed_forward_impl.1} parent=11 // pred_fallthru
          _
      $region12: #{_feed_forward_impl.1} parent=5 // pred_fallthru
        _
      %p184 = scmp.lt.s32.totalorder %s17, 3
      // Predicated region
      $region17: #{_feed_forward_impl.1} parent=5 // pred_check
        %p185 = pneg %p184
      $region18: #{_feed_forward_impl.1} parent=5 // pred_check_branch
        %187 = sbr.rel (%p185) target = $region20
      $region19: #{_feed_forward_impl.1} parent=5 // pred_region
        // Predicated region
        $region21: #{_feed_forward_impl.1} parent=19 // pred_check
          %p188 = pneg %p75
        $region22: #{_feed_forward_impl.1} parent=19 // pred_check_branch
          %190 = sbr.rel (%p188) target = $region24
        $region23: #{_feed_forward_impl.1} parent=19 // pred_region
          %s191 = sand.u32 %s65, 1
          %s192 = scalar_lea.sflag [#allocation4], %s191
          %s193 = sand.u32 %s65, 1
          %s194 = smul.addr %s193, 256
          %s195 = scalar_lea.vmem [#allocation3], %s194
          %s196 = smul.u32 2, %s25
          %s198 = ssub.s32 4096, 4096
          %199 = vsyncadd %s192, %s198
          %s200 = smul.addr %s196, 64
          %s201 = scalar_lea.hbm %s1, %s200
          %s202 = sshll.u32 %s195, 4
          %s203 = int_to_ptr.vmem [resolvable:$true] %s202
          %208 = dma.hbm_to_vmem [thread:$0]  %s201, 4096, %s203, %s192, 384, 128, 8
        $region24: #{_feed_forward_impl.1} parent=19 // pred_fallthru
          _
        // Predicated region
        $region25: #{_feed_forward_impl.1} parent=19 // pred_check
          %p209 = pneg %p101
        $region26: #{_feed_forward_impl.1} parent=19 // pred_check_branch
          %211 = sbr.rel (%p209) target = $region28
        $region27: #{_feed_forward_impl.1} parent=19 // pred_region
          %s212 = sand.u32 %s17, 1
          %s213 = scalar_lea.sflag [#allocation7], %s212
          %s214 = sand.u32 %s91, 1
          %s215 = smul.addr %s214, 256
          %s216 = scalar_lea.vmem [#allocation6], %s215
          %s217 = smul.u32 2, %s25
          %s219 = ssub.s32 4096, 4096
          %220 = vsyncadd %s213, %s219
          %s221 = smul.addr %s217, 64
          %s222 = scalar_lea.hbm %s2, %s221
          %s223 = sshll.u32 %s216, 4
          %s224 = int_to_ptr.vmem [resolvable:$true] %s223
          %229 = dma.hbm_to_vmem [thread:$0]  %s222, 4096, %s224, %s213, 384, 128, 8
        $region28: #{_feed_forward_impl.1} parent=19 // pred_fallthru
          _
        // Predicated region
        $region29: #{_feed_forward_impl.1} parent=19 // pred_check
          %p230 = pneg %p127
        $region30: #{_feed_forward_impl.1} parent=19 // pred_check_branch
          %232 = sbr.rel (%p230) target = $region32
        $region31: #{_feed_forward_impl.1} parent=19 // pred_region
          %s233 = sand.u32 %s17, 1
          %s234 = scalar_lea.sflag [#allocation7], %s233
          %s235 = sand.u32 %s117, 1
          %s236 = smul.addr %s235, 256
          %s237 = scalar_lea.vmem [#allocation8], %s236
          %s238 = smul.u32 32, %s25
          %s240 = ssub.s32 4096, 4096
          %241 = vsyncadd %s234, %s240
          %s242 = smul.addr %s238, 2
          %s243 = smul.addr %s242, 64
          %s244 = scalar_lea.hbm %s3, %s243
          %s245 = sshll.u32 %s237, 4
          %s246 = int_to_ptr.vmem [resolvable:$true] %s245
          %251 = dma.hbm_to_vmem [thread:$0]  %s244, 4096, %s246, %s234, 128, 128, 8
        $region32: #{_feed_forward_impl.1} parent=19 // pred_fallthru
          _
      $region20: #{_feed_forward_impl.1} parent=5 // pred_fallthru
        _
      %p252 = scmp.le.s32.totalorder 1, %s17
      %p253 = scmp.lt.s32.totalorder %s17, 4
      %p254 = pnand %p252, %p253
      %p255 = pneg %p254
      // Predicated region
      $region33: #{_feed_forward_impl.1} parent=5 // pred_check
        _
      $region34: #{_feed_forward_impl.1} parent=5 // pred_check_branch
        %257 = sbr.rel (%p254) target = $region36
      $region35: #{_feed_forward_impl.1} parent=5 // pred_region
        %s258 = ssub.s32 %s17, 1
        %s259 = sand.u32 %s68, 1
        %s260 = scalar_lea.sflag [#allocation4], %s259
        %s261 = sand.u32 %s68, 1
        %s262 = smul.addr %s261, 256
        %s263 = scalar_lea.vmem [#allocation3], %s262
        // Predicated region
        $region37: #{_feed_forward_impl.1} parent=35 // pred_check
          %p264 = pneg %p81
        $region38: #{_feed_forward_impl.1} parent=35 // pred_check_branch
          %266 = sbr.rel (%p264) target = $region40
        $region39: #{_feed_forward_impl.1} parent=35 // pred_region
          %267 = dma.done %s260, 4096
        $region40: #{_feed_forward_impl.1} parent=35 // pred_fallthru
          _
        %s268 = sand.u32 %s22, 1
        %s269 = scalar_lea.sflag [#allocation7], %s268
        %s270 = sand.u32 %s94, 1
        %s271 = smul.addr %s270, 256
        %s272 = scalar_lea.vmem [#allocation6], %s271
        // Predicated region
        $region41: #{_feed_forward_impl.1} parent=35 // pred_check
          %p273 = pneg %p107
        $region42: #{_feed_forward_impl.1} parent=35 // pred_check_branch
          %275 = sbr.rel (%p273) target = $region44
        $region43: #{_feed_forward_impl.1} parent=35 // pred_region
          %276 = dma.done %s269, 4096
        $region44: #{_feed_forward_impl.1} parent=35 // pred_fallthru
          _
        %s277 = sand.u32 %s22, 1
        %s278 = scalar_lea.sflag [#allocation7], %s277
        %s279 = sand.u32 %s120, 1
        %s280 = smul.addr %s279, 256
        %s281 = scalar_lea.vmem [#allocation8], %s280
        // Predicated region
        $region45: #{_feed_forward_impl.1} parent=35 // pred_check
          %p282 = pneg %p133
        $region46: #{_feed_forward_impl.1} parent=35 // pred_check_branch
          %284 = sbr.rel (%p282) target = $region48
        $region47: #{_feed_forward_impl.1} parent=35 // pred_region
          %285 = dma.done %s278, 4096
        $region48: #{_feed_forward_impl.1} parent=35 // pred_fallthru
          _
        %s286 = smul.u32 2, %s26
        %p287 = scmp.lt.s32.totalorder %s286, 1
        %s288 = scalar_select %p287, %s286, 1
        %s289 = smul.addr %s288, 2
        %s290 = smul.addr %s289, 4
        %s291 = scalar_lea.vmem %s0, %s290
        %p292 = pneg %p55
        %p293 = pneg %p52
        %s294 = sand.u32 %s68, 1
        %s295 = scalar_lea.sflag [#allocation4], %s294
        %s296 = sand.u32 %s68, 1
        %s297 = smul.addr %s296, 256
        %s298 = scalar_lea.vmem [#allocation3], %s297
        %p299 = pneg %p81
        %p300 = pneg %p78
        %s301 = sand.u32 %s22, 1
        %s302 = scalar_lea.sflag [#allocation7], %s301
        %s303 = sand.u32 %s94, 1
        %s304 = smul.addr %s303, 256
        %s305 = scalar_lea.vmem [#allocation6], %s304
        %p306 = pneg %p107
        %p307 = pneg %p104
        %s308 = sand.u32 %s22, 1
        %s309 = scalar_lea.sflag [#allocation7], %s308
        %s310 = sand.u32 %s120, 1
        %s311 = smul.addr %s310, 256
        %s312 = scalar_lea.vmem [#allocation8], %s311
        %p313 = pneg %p133
        %p314 = pneg %p130
        %p315 = pneg %p159
        %p316 = pneg %p156
        %s317 = smul.u32 2, %s26
        %p318 = scmp.lt.s32.totalorder %s317, 1
        %s319 = scalar_select %p318, %s317, 1
        %s320 = smul.addr %s319, 2
        %s321 = smul.addr %s320, 4
        %s322 = scalar_lea.vmem %s0, %s321
        %s323 = smul.u32 2, %s26
        %s324 = smul.u32 2, %s27
        %s325 = smul.u32 2, %s27
        %s326 = smul.u32 32, %s27
        %s327 = smul.u32 2, %s26
        %p328 = scmp.eq.s32.totalorder %s27, 0
        // Predicated region
        $region49: #{_feed_forward_impl.1} parent=35 // pred_check
          %p329 = pneg %p328
        $region50: #{_feed_forward_impl.1} parent=35 // pred_check_branch
          %331 = sbr.rel (%p329) target = $region52
        $region51: #{_feed_forward_impl.1} parent=35 // pred_region
          %332 = vst [vmem:[#allocation2] sm:$0xff] 0.0
          %333 = vst [vmem:[#allocation2 + $0x8] sm:$0xff] 0.0
          %334 = vst [vmem:[#allocation2 + $0x10] sm:$0xff] 0.0
          %335 = vst [vmem:[#allocation2 + $0x18] sm:$0xff] 0.0
        $region52: #{_feed_forward_impl.1} parent=35 // pred_fallthru
          _
        %v336 = vld [vmem:[%s322] sm:$0xff]
        %v337 = vld [vmem:[%s322 + $0x8] sm:$0xff]
        %v338 = vld [vmem:[%s263] sm:$0xff]
        %v339 = vld [vmem:[%s263 + $0x8] sm:$0xff]
        %v340 = vld [vmem:[%s263 + $0x10] sm:$0xff]
        %v341 = vld [vmem:[%s263 + $0x18] sm:$0xff]
        %v342 = vld [vmem:[%s263 + $0x20] sm:$0xff]
        %v343 = vld [vmem:[%s263 + $0x28] sm:$0xff]
        %v344 = vld [vmem:[%s263 + $0x30] sm:$0xff]
        %v345 = vld [vmem:[%s263 + $0x38] sm:$0xff]
        %v346 = vld [vmem:[%s263 + $0x40] sm:$0xff]
        %v347 = vld [vmem:[%s263 + $0x48] sm:$0xff]
        %v348 = vld [vmem:[%s263 + $0x50] sm:$0xff]
        %v349 = vld [vmem:[%s263 + $0x58] sm:$0xff]
        %v350 = vld [vmem:[%s263 + $0x60] sm:$0xff]
        %v351 = vld [vmem:[%s263 + $0x68] sm:$0xff]
        %v352 = vld [vmem:[%s263 + $0x70] sm:$0xff]
        %v353 = vld [vmem:[%s263 + $0x78] sm:$0xff]
        %v354 = vld [vmem:[%s263 + $0x80] sm:$0xff]
        %v355 = vld [vmem:[%s263 + $0x88] sm:$0xff]
        %v356 = vld [vmem:[%s263 + $0x90] sm:$0xff]
        %v357 = vld [vmem:[%s263 + $0x98] sm:$0xff]
        %v358 = vld [vmem:[%s263 + $0xa0] sm:$0xff]
        %v359 = vld [vmem:[%s263 + $0xa8] sm:$0xff]
        %v360 = vld [vmem:[%s263 + $0xb0] sm:$0xff]
        %v361 = vld [vmem:[%s263 + $0xb8] sm:$0xff]
        %v362 = vld [vmem:[%s263 + $0xc0] sm:$0xff]
        %v363 = vld [vmem:[%s263 + $0xc8] sm:$0xff]
        %v364 = vld [vmem:[%s263 + $0xd0] sm:$0xff]
        %v365 = vld [vmem:[%s263 + $0xd8] sm:$0xff]
        %v366 = vld [vmem:[%s263 + $0xe0] sm:$0xff]
        %v367 = vld [vmem:[%s263 + $0xe8] sm:$0xff]
        %v368 = vld [vmem:[%s263 + $0xf0] sm:$0xff]
        %v369 = vld [vmem:[%s263 + $0xf8] sm:$0xff]
        %v372 = vunpack.c.l.b16 %v336
        %v373 = vunpack.c.h.b16 %v336
        %v374 = vunpack.c.l.b16 %v337
        %v375 = vunpack.c.h.b16 %v337
        %v376 = vpack.c.b16 %v374, %v372
        %v377 = vpack.c.b16 %v375, %v373
        %v412 = vunpack.c.l.b16 %v338
        %v413 = vunpack.c.h.b16 %v338
        %v414 = vunpack.c.l.b16 %v339
        %v415 = vunpack.c.h.b16 %v339
        %v416 = vunpack.c.l.b16 %v340
        %v417 = vunpack.c.h.b16 %v340
        %v418 = vunpack.c.l.b16 %v341
        %v419 = vunpack.c.h.b16 %v341
        %v420 = vunpack.c.l.b16 %v342
        %v421 = vunpack.c.h.b16 %v342
        %v422 = vunpack.c.l.b16 %v343
        %v423 = vunpack.c.h.b16 %v343
        %v424 = vunpack.c.l.b16 %v344
        %v425 = vunpack.c.h.b16 %v344
        %v426 = vunpack.c.l.b16 %v345
        %v427 = vunpack.c.h.b16 %v345
        %v428 = vunpack.c.l.b16 %v346
        %v429 = vunpack.c.h.b16 %v346
        %v430 = vunpack.c.l.b16 %v347
        %v431 = vunpack.c.h.b16 %v347
        %v432 = vunpack.c.l.b16 %v348
        %v433 = vunpack.c.h.b16 %v348
        %v434 = vunpack.c.l.b16 %v349
        %v435 = vunpack.c.h.b16 %v349
        %v436 = vunpack.c.l.b16 %v350
        %v437 = vunpack.c.h.b16 %v350
        %v438 = vunpack.c.l.b16 %v351
        %v439 = vunpack.c.h.b16 %v351
        %v440 = vunpack.c.l.b16 %v352
        %v441 = vunpack.c.h.b16 %v352
        %v442 = vunpack.c.l.b16 %v353
        %v443 = vunpack.c.h.b16 %v353
        %v444 = vunpack.c.l.b16 %v354
        %v445 = vunpack.c.h.b16 %v354
        %v446 = vunpack.c.l.b16 %v355
        %v447 = vunpack.c.h.b16 %v355
        %v448 = vunpack.c.l.b16 %v356
        %v449 = vunpack.c.h.b16 %v356
        %v450 = vunpack.c.l.b16 %v357
        %v451 = vunpack.c.h.b16 %v357
        %v452 = vunpack.c.l.b16 %v358
        %v453 = vunpack.c.h.b16 %v358
        %v454 = vunpack.c.l.b16 %v359
        %v455 = vunpack.c.h.b16 %v359
        %v456 = vunpack.c.l.b16 %v360
        %v457 = vunpack.c.h.b16 %v360
        %v458 = vunpack.c.l.b16 %v361
        %v459 = vunpack.c.h.b16 %v361
        %v460 = vunpack.c.l.b16 %v362
        %v461 = vunpack.c.h.b16 %v362
        %v462 = vunpack.c.l.b16 %v363
        %v463 = vunpack.c.h.b16 %v363
        %v464 = vunpack.c.l.b16 %v364
        %v465 = vunpack.c.h.b16 %v364
        %v466 = vunpack.c.l.b16 %v365
        %v467 = vunpack.c.h.b16 %v365
        %v468 = vunpack.c.l.b16 %v366
        %v469 = vunpack.c.h.b16 %v366
        %v470 = vunpack.c.l.b16 %v367
        %v471 = vunpack.c.h.b16 %v367
        %v472 = vunpack.c.l.b16 %v368
        %v473 = vunpack.c.h.b16 %v368
        %v474 = vunpack.c.l.b16 %v369
        %v475 = vunpack.c.h.b16 %v369
        %v476 = vpack.c.b16 %v414, %v412
        %v477 = vpack.c.b16 %v415, %v413
        %v478 = vpack.c.b16 %v418, %v416
        %v479 = vpack.c.b16 %v419, %v417
        %v480 = vpack.c.b16 %v422, %v420
        %v481 = vpack.c.b16 %v423, %v421
        %v482 = vpack.c.b16 %v426, %v424
        %v483 = vpack.c.b16 %v427, %v425
        %v484 = vpack.c.b16 %v430, %v428
        %v485 = vpack.c.b16 %v431, %v429
        %v486 = vpack.c.b16 %v434, %v432
        %v487 = vpack.c.b16 %v435, %v433
        %v488 = vpack.c.b16 %v438, %v436
        %v489 = vpack.c.b16 %v439, %v437
        %v490 = vpack.c.b16 %v442, %v440
        %v491 = vpack.c.b16 %v443, %v441
        %v492 = vpack.c.b16 %v446, %v444
        %v493 = vpack.c.b16 %v447, %v445
        %v494 = vpack.c.b16 %v450, %v448
        %v495 = vpack.c.b16 %v451, %v449
        %v496 = vpack.c.b16 %v454, %v452
        %v497 = vpack.c.b16 %v455, %v453
        %v498 = vpack.c.b16 %v458, %v456
        %v499 = vpack.c.b16 %v459, %v457
        %v500 = vpack.c.b16 %v462, %v460
        %v501 = vpack.c.b16 %v463, %v461
        %v502 = vpack.c.b16 %v466, %v464
        %v503 = vpack.c.b16 %v467, %v465
        %v504 = vpack.c.b16 %v470, %v468
        %v505 = vpack.c.b16 %v471, %v469
        %v506 = vpack.c.b16 %v474, %v472
        %v507 = vpack.c.b16 %v475, %v473
        %540 = vmatprep.subr.bf16.mxu0 %v491
        %541 = vmatpush1.bf16.msra.mxu0 %v490
        %542 = vmatprep.subr.bf16.mxu0 %v489
        %543 = vmatpush1.bf16.msra.mxu0 %v488
        %544 = vmatprep.subr.bf16.mxu0 %v487
        %545 = vmatpush1.bf16.msra.mxu0 %v486
        %546 = vmatprep.subr.bf16.mxu0 %v485
        %547 = vmatpush1.bf16.msra.mxu0 %v484
        %548 = vmatprep.subr.bf16.mxu0 %v483
        %549 = vmatpush1.bf16.msra.mxu0 %v482
        %550 = vmatprep.subr.bf16.mxu0 %v481
        %551 = vmatpush1.bf16.msra.mxu0 %v480
        %552 = vmatprep.subr.bf16.mxu0 %v479
        %553 = vmatpush1.bf16.msra.mxu0 %v478
        %554 = vmatprep.subr.bf16.mxu0 %v477
        %555 = vmatpush1.bf16.msra.mxu0 %v476
        %556 = vmatprep.subr.bf16.mxu0 %v507
        %557 = vmatpush2.bf16.msra.mxu0 %v506
        %558 = vmatprep.subr.bf16.mxu0 %v505
        %559 = vmatpush2.bf16.msra.mxu0 %v504
        %560 = vmatprep.subr.bf16.mxu0 %v503
        %561 = vmatpush2.bf16.msra.mxu0 %v502
        %562 = vmatprep.subr.bf16.mxu0 %v501
        %563 = vmatpush2.bf16.msra.mxu0 %v500
        %564 = vmatprep.subr.bf16.mxu0 %v499
        %565 = vmatpush2.bf16.msra.mxu0 %v498
        %566 = vmatprep.subr.bf16.mxu0 %v497
        %567 = vmatpush2.bf16.msra.mxu0 %v496
        %568 = vmatprep.subr.bf16.mxu0 %v495
        %569 = vmatpush2.bf16.msra.mxu0 %v494
        %570 = vmatprep.subr.bf16.mxu0 %v493
        %571 = vmatpush2.bf16.msra.mxu0 %v492
        %572 = vmatprep.mubr.bf16.mxu0 %v377
        %573 = vmatmul.mubr.bf16.gmra.mxu0 %v376
        %v574 = vpop.f32.mrf.mxu0
        %v575 = vadd.f32 0.0, %v574
        %v576 = vpop.f32.mrf.mxu0
        %v577 = vadd.f32 0.0, %v576
        %v578 = vpop.f32.mrf.mxu0
        %v579 = vadd.f32 0.0, %v578
        %v580 = vpop.f32.mrf.mxu0
        %v581 = vadd.f32 0.0, %v580
        %582 = vdwg.mxu0
        %v583 = vld [vmem:[%s272] sm:$0xff]
        %v584 = vld [vmem:[%s272 + $0x8] sm:$0xff]
        %v585 = vld [vmem:[%s272 + $0x10] sm:$0xff]
        %v586 = vld [vmem:[%s272 + $0x18] sm:$0xff]
        %v587 = vld [vmem:[%s272 + $0x20] sm:$0xff]
        %v588 = vld [vmem:[%s272 + $0x28] sm:$0xff]
        %v589 = vld [vmem:[%s272 + $0x30] sm:$0xff]
        %v590 = vld [vmem:[%s272 + $0x38] sm:$0xff]
        %v591 = vld [vmem:[%s272 + $0x40] sm:$0xff]
        %v592 = vld [vmem:[%s272 + $0x48] sm:$0xff]
        %v593 = vld [vmem:[%s272 + $0x50] sm:$0xff]
        %v594 = vld [vmem:[%s272 + $0x58] sm:$0xff]
        %v595 = vld [vmem:[%s272 + $0x60] sm:$0xff]
        %v596 = vld [vmem:[%s272 + $0x68] sm:$0xff]
        %v597 = vld [vmem:[%s272 + $0x70] sm:$0xff]
        %v598 = vld [vmem:[%s272 + $0x78] sm:$0xff]
        %v599 = vld [vmem:[%s272 + $0x80] sm:$0xff]
        %v600 = vld [vmem:[%s272 + $0x88] sm:$0xff]
        %v601 = vld [vmem:[%s272 + $0x90] sm:$0xff]
        %v602 = vld [vmem:[%s272 + $0x98] sm:$0xff]
        %v603 = vld [vmem:[%s272 + $0xa0] sm:$0xff]
        %v604 = vld [vmem:[%s272 + $0xa8] sm:$0xff]
        %v605 = vld [vmem:[%s272 + $0xb0] sm:$0xff]
        %v606 = vld [vmem:[%s272 + $0xb8] sm:$0xff]
        %v607 = vld [vmem:[%s272 + $0xc0] sm:$0xff]
        %v608 = vld [vmem:[%s272 + $0xc8] sm:$0xff]
        %v609 = vld [vmem:[%s272 + $0xd0] sm:$0xff]
        %v610 = vld [vmem:[%s272 + $0xd8] sm:$0xff]
        %v611 = vld [vmem:[%s272 + $0xe0] sm:$0xff]
        %v612 = vld [vmem:[%s272 + $0xe8] sm:$0xff]
        %v613 = vld [vmem:[%s272 + $0xf0] sm:$0xff]
        %v614 = vld [vmem:[%s272 + $0xf8] sm:$0xff]
        %v647 = vunpack.c.l.b16 %v583
        %v648 = vunpack.c.h.b16 %v583
        %v649 = vunpack.c.l.b16 %v584
        %v650 = vunpack.c.h.b16 %v584
        %v651 = vunpack.c.l.b16 %v585
        %v652 = vunpack.c.h.b16 %v585
        %v653 = vunpack.c.l.b16 %v586
        %v654 = vunpack.c.h.b16 %v586
        %v655 = vunpack.c.l.b16 %v587
        %v656 = vunpack.c.h.b16 %v587
        %v657 = vunpack.c.l.b16 %v588
        %v658 = vunpack.c.h.b16 %v588
        %v659 = vunpack.c.l.b16 %v589
        %v660 = vunpack.c.h.b16 %v589
        %v661 = vunpack.c.l.b16 %v590
        %v662 = vunpack.c.h.b16 %v590
        %v663 = vunpack.c.l.b16 %v591
        %v664 = vunpack.c.h.b16 %v591
        %v665 = vunpack.c.l.b16 %v592
        %v666 = vunpack.c.h.b16 %v592
        %v667 = vunpack.c.l.b16 %v593
        %v668 = vunpack.c.h.b16 %v593
        %v669 = vunpack.c.l.b16 %v594
        %v670 = vunpack.c.h.b16 %v594
        %v671 = vunpack.c.l.b16 %v595
        %v672 = vunpack.c.h.b16 %v595
        %v673 = vunpack.c.l.b16 %v596
        %v674 = vunpack.c.h.b16 %v596
        %v675 = vunpack.c.l.b16 %v597
        %v676 = vunpack.c.h.b16 %v597
        %v677 = vunpack.c.l.b16 %v598
        %v678 = vunpack.c.h.b16 %v598
        %v679 = vunpack.c.l.b16 %v599
        %v680 = vunpack.c.h.b16 %v599
        %v681 = vunpack.c.l.b16 %v600
        %v682 = vunpack.c.h.b16 %v600
        %v683 = vunpack.c.l.b16 %v601
        %v684 = vunpack.c.h.b16 %v601
        %v685 = vunpack.c.l.b16 %v602
        %v686 = vunpack.c.h.b16 %v602
        %v687 = vunpack.c.l.b16 %v603
        %v688 = vunpack.c.h.b16 %v603
        %v689 = vunpack.c.l.b16 %v604
        %v690 = vunpack.c.h.b16 %v604
        %v691 = vunpack.c.l.b16 %v605
        %v692 = vunpack.c.h.b16 %v605
        %v693 = vunpack.c.l.b16 %v606
        %v694 = vunpack.c.h.b16 %v606
        %v695 = vunpack.c.l.b16 %v607
        %v696 = vunpack.c.h.b16 %v607
        %v697 = vunpack.c.l.b16 %v608
        %v698 = vunpack.c.h.b16 %v608
        %v699 = vunpack.c.l.b16 %v609
        %v700 = vunpack.c.h.b16 %v609
        %v701 = vunpack.c.l.b16 %v610
        %v702 = vunpack.c.h.b16 %v610
        %v703 = vunpack.c.l.b16 %v611
        %v704 = vunpack.c.h.b16 %v611
        %v705 = vunpack.c.l.b16 %v612
        %v706 = vunpack.c.h.b16 %v612
        %v707 = vunpack.c.l.b16 %v613
        %v708 = vunpack.c.h.b16 %v613
        %v709 = vunpack.c.l.b16 %v614
        %v710 = vunpack.c.h.b16 %v614
        %v711 = vpack.c.b16 %v649, %v647
        %v712 = vpack.c.b16 %v650, %v648
        %v713 = vpack.c.b16 %v653, %v651
        %v714 = vpack.c.b16 %v654, %v652
        %v715 = vpack.c.b16 %v657, %v655
        %v716 = vpack.c.b16 %v658, %v656
        %v717 = vpack.c.b16 %v661, %v659
        %v718 = vpack.c.b16 %v662, %v660
        %v719 = vpack.c.b16 %v665, %v663
        %v720 = vpack.c.b16 %v666, %v664
        %v721 = vpack.c.b16 %v669, %v667
        %v722 = vpack.c.b16 %v670, %v668
        %v723 = vpack.c.b16 %v673, %v671
        %v724 = vpack.c.b16 %v674, %v672
        %v725 = vpack.c.b16 %v677, %v675
        %v726 = vpack.c.b16 %v678, %v676
        %v727 = vpack.c.b16 %v681, %v679
        %v728 = vpack.c.b16 %v682, %v680
        %v729 = vpack.c.b16 %v685, %v683
        %v730 = vpack.c.b16 %v686, %v684
        %v731 = vpack.c.b16 %v689, %v687
        %v732 = vpack.c.b16 %v690, %v688
        %v733 = vpack.c.b16 %v693, %v691
        %v734 = vpack.c.b16 %v694, %v692
        %v735 = vpack.c.b16 %v697, %v695
        %v736 = vpack.c.b16 %v698, %v696
        %v737 = vpack.c.b16 %v701, %v699
        %v738 = vpack.c.b16 %v702, %v700
        %v739 = vpack.c.b16 %v705, %v703
        %v740 = vpack.c.b16 %v706, %v704
        %v741 = vpack.c.b16 %v709, %v707
        %v742 = vpack.c.b16 %v710, %v708
        %775 = vmatprep.subr.bf16.mxu0 %v726
        %776 = vmatpush1.bf16.msra.mxu0 %v725
        %777 = vmatprep.subr.bf16.mxu0 %v724
        %778 = vmatpush1.bf16.msra.mxu0 %v723
        %779 = vmatprep.subr.bf16.mxu0 %v722
        %780 = vmatpush1.bf16.msra.mxu0 %v721
        %781 = vmatprep.subr.bf16.mxu0 %v720
        %782 = vmatpush1.bf16.msra.mxu0 %v719
        %783 = vmatprep.subr.bf16.mxu0 %v718
        %784 = vmatpush1.bf16.msra.mxu0 %v717
        %785 = vmatprep.subr.bf16.mxu0 %v716
        %786 = vmatpush1.bf16.msra.mxu0 %v715
        %787 = vmatprep.subr.bf16.mxu0 %v714
        %788 = vmatpush1.bf16.msra.mxu0 %v713
        %789 = vmatprep.subr.bf16.mxu0 %v712
        %790 = vmatpush1.bf16.msra.mxu0 %v711
        %791 = vmatprep.subr.bf16.mxu0 %v742
        %792 = vmatpush2.bf16.msra.mxu0 %v741
        %793 = vmatprep.subr.bf16.mxu0 %v740
        %794 = vmatpush2.bf16.msra.mxu0 %v739
        %795 = vmatprep.subr.bf16.mxu0 %v738
        %796 = vmatpush2.bf16.msra.mxu0 %v737
        %797 = vmatprep.subr.bf16.mxu0 %v736
        %798 = vmatpush2.bf16.msra.mxu0 %v735
        %799 = vmatprep.subr.bf16.mxu0 %v734
        %800 = vmatpush2.bf16.msra.mxu0 %v733
        %801 = vmatprep.subr.bf16.mxu0 %v732
        %802 = vmatpush2.bf16.msra.mxu0 %v731
        %803 = vmatprep.subr.bf16.mxu0 %v730
        %804 = vmatpush2.bf16.msra.mxu0 %v729
        %805 = vmatprep.subr.bf16.mxu0 %v728
        %806 = vmatpush2.bf16.msra.mxu0 %v727
        %807 = vmatprep.mubr.bf16.mxu0 %v377
        %808 = vmatmul.mubr.bf16.gmra.mxu0 %v376
        %v809 = vpop.f32.mrf.mxu0
        %v810 = vadd.f32 0.0, %v809
        %v811 = vpop.f32.mrf.mxu0
        %v812 = vadd.f32 0.0, %v811
        %v813 = vpop.f32.mrf.mxu0
        %v814 = vadd.f32 0.0, %v813
        %v815 = vpop.f32.mrf.mxu0
        %v816 = vadd.f32 0.0, %v815
        %817 = vdwg.mxu0
        %v818 = vxor.u32 %v575, 2147483648
        %v819 = vxor.u32 %v577, 2147483648
        %v820 = vxor.u32 %v579, 2147483648
        %v821 = vxor.u32 %v581, 2147483648
        %v822 = vmul.f32 %v818, 1.442695
        %v823 = vpow.pop %v822
        %v824 = vmul.f32 %v819, 1.442695
        %v825 = vpow.pop %v824
        %v826 = vmul.f32 %v820, 1.442695
        %v827 = vpow.pop %v826
        %v828 = vmul.f32 %v821, 1.442695
        %v829 = vpow.pop %v828
        %v830 = vadd.f32 %v823, 1.0
        %v831 = vadd.f32 %v825, 1.0
        %v832 = vadd.f32 %v827, 1.0
        %v833 = vadd.f32 %v829, 1.0
        %v834 = vrcp.pop %v830
        %v835 = vmul.f32 1.0, %v834
        %v836 = vrcp.pop %v831
        %v837 = vmul.f32 1.0, %v836
        %v838 = vrcp.pop %v832
        %v839 = vmul.f32 1.0, %v838
        %v840 = vrcp.pop %v833
        %v841 = vmul.f32 1.0, %v840
        %v842 = vmul.f32 %v575, %v835
        %v843 = vmul.f32 %v577, %v837
        %v844 = vmul.f32 %v579, %v839
        %v845 = vmul.f32 %v581, %v841
        %v846 = vmul.f32 %v842, %v810
        %v847 = vmul.f32 %v843, %v812
        %v848 = vmul.f32 %v844, %v814
        %v849 = vmul.f32 %v845, %v816
        %v850 = vld [vmem:[#allocation2] sm:$0xff]
        %v851 = vld [vmem:[#allocation2 + $0x8] sm:$0xff]
        %v852 = vld [vmem:[#allocation2 + $0x10] sm:$0xff]
        %v853 = vld [vmem:[#allocation2 + $0x18] sm:$0xff]
        %v854 = vpack.c.bf16 %v848, %v846
        %v855 = vpack.c.bf16 %v849, %v847
        %v856 = vld [vmem:[%s281] sm:$0xff]
        %v857 = vld [vmem:[%s281 + $0x8] sm:$0xff]
        %v858 = vld [vmem:[%s281 + $0x10] sm:$0xff]
        %v859 = vld [vmem:[%s281 + $0x18] sm:$0xff]
        %v860 = vld [vmem:[%s281 + $0x20] sm:$0xff]
        %v861 = vld [vmem:[%s281 + $0x28] sm:$0xff]
        %v862 = vld [vmem:[%s281 + $0x30] sm:$0xff]
        %v863 = vld [vmem:[%s281 + $0x38] sm:$0xff]
        %v864 = vld [vmem:[%s281 + $0x40] sm:$0xff]
        %v865 = vld [vmem:[%s281 + $0x48] sm:$0xff]
        %v866 = vld [vmem:[%s281 + $0x50] sm:$0xff]
        %v867 = vld [vmem:[%s281 + $0x58] sm:$0xff]
        %v868 = vld [vmem:[%s281 + $0x60] sm:$0xff]
        %v869 = vld [vmem:[%s281 + $0x68] sm:$0xff]
        %v870 = vld [vmem:[%s281 + $0x70] sm:$0xff]
        %v871 = vld [vmem:[%s281 + $0x78] sm:$0xff]
        %v872 = vld [vmem:[%s281 + $0x80] sm:$0xff]
        %v873 = vld [vmem:[%s281 + $0x88] sm:$0xff]
        %v874 = vld [vmem:[%s281 + $0x90] sm:$0xff]
        %v875 = vld [vmem:[%s281 + $0x98] sm:$0xff]
        %v876 = vld [vmem:[%s281 + $0xa0] sm:$0xff]
        %v877 = vld [vmem:[%s281 + $0xa8] sm:$0xff]
        %v878 = vld [vmem:[%s281 + $0xb0] sm:$0xff]
        %v879 = vld [vmem:[%s281 + $0xb8] sm:$0xff]
        %v880 = vld [vmem:[%s281 + $0xc0] sm:$0xff]
        %v881 = vld [vmem:[%s281 + $0xc8] sm:$0xff]
        %v882 = vld [vmem:[%s281 + $0xd0] sm:$0xff]
        %v883 = vld [vmem:[%s281 + $0xd8] sm:$0xff]
        %v884 = vld [vmem:[%s281 + $0xe0] sm:$0xff]
        %v885 = vld [vmem:[%s281 + $0xe8] sm:$0xff]
        %v886 = vld [vmem:[%s281 + $0xf0] sm:$0xff]
        %v887 = vld [vmem:[%s281 + $0xf8] sm:$0xff]
        %v920 = vunpack.c.l.b16 %v856
        %v921 = vunpack.c.h.b16 %v856
        %v922 = vunpack.c.l.b16 %v857
        %v923 = vunpack.c.h.b16 %v857
        %v924 = vunpack.c.l.b16 %v858
        %v925 = vunpack.c.h.b16 %v858
        %v926 = vunpack.c.l.b16 %v859
        %v927 = vunpack.c.h.b16 %v859
        %v928 = vunpack.c.l.b16 %v860
        %v929 = vunpack.c.h.b16 %v860
        %v930 = vunpack.c.l.b16 %v861
        %v931 = vunpack.c.h.b16 %v861
        %v932 = vunpack.c.l.b16 %v862
        %v933 = vunpack.c.h.b16 %v862
        %v934 = vunpack.c.l.b16 %v863
        %v935 = vunpack.c.h.b16 %v863
        %v936 = vunpack.c.l.b16 %v864
        %v937 = vunpack.c.h.b16 %v864
        %v938 = vunpack.c.l.b16 %v865
        %v939 = vunpack.c.h.b16 %v865
        %v940 = vunpack.c.l.b16 %v866
        %v941 = vunpack.c.h.b16 %v866
        %v942 = vunpack.c.l.b16 %v867
        %v943 = vunpack.c.h.b16 %v867
        %v944 = vunpack.c.l.b16 %v868
        %v945 = vunpack.c.h.b16 %v868
        %v946 = vunpack.c.l.b16 %v869
        %v947 = vunpack.c.h.b16 %v869
        %v948 = vunpack.c.l.b16 %v870
        %v949 = vunpack.c.h.b16 %v870
        %v950 = vunpack.c.l.b16 %v871
        %v951 = vunpack.c.h.b16 %v871
        %v952 = vunpack.c.l.b16 %v872
        %v953 = vunpack.c.h.b16 %v872
        %v954 = vunpack.c.l.b16 %v873
        %v955 = vunpack.c.h.b16 %v873
        %v956 = vunpack.c.l.b16 %v874
        %v957 = vunpack.c.h.b16 %v874
        %v958 = vunpack.c.l.b16 %v875
        %v959 = vunpack.c.h.b16 %v875
        %v960 = vunpack.c.l.b16 %v876
        %v961 = vunpack.c.h.b16 %v876
        %v962 = vunpack.c.l.b16 %v877
        %v963 = vunpack.c.h.b16 %v877
        %v964 = vunpack.c.l.b16 %v878
        %v965 = vunpack.c.h.b16 %v878
        %v966 = vunpack.c.l.b16 %v879
        %v967 = vunpack.c.h.b16 %v879
        %v968 = vunpack.c.l.b16 %v880
        %v969 = vunpack.c.h.b16 %v880
        %v970 = vunpack.c.l.b16 %v881
        %v971 = vunpack.c.h.b16 %v881
        %v972 = vunpack.c.l.b16 %v882
        %v973 = vunpack.c.h.b16 %v882
        %v974 = vunpack.c.l.b16 %v883
        %v975 = vunpack.c.h.b16 %v883
        %v976 = vunpack.c.l.b16 %v884
        %v977 = vunpack.c.h.b16 %v884
        %v978 = vunpack.c.l.b16 %v885
        %v979 = vunpack.c.h.b16 %v885
        %v980 = vunpack.c.l.b16 %v886
        %v981 = vunpack.c.h.b16 %v886
        %v982 = vunpack.c.l.b16 %v887
        %v983 = vunpack.c.h.b16 %v887
        %v984 = vpack.c.b16 %v922, %v920
        %v985 = vpack.c.b16 %v923, %v921
        %v986 = vpack.c.b16 %v926, %v924
        %v987 = vpack.c.b16 %v927, %v925
        %v988 = vpack.c.b16 %v930, %v928
        %v989 = vpack.c.b16 %v931, %v929
        %v990 = vpack.c.b16 %v934, %v932
        %v991 = vpack.c.b16 %v935, %v933
        %v992 = vpack.c.b16 %v938, %v936
        %v993 = vpack.c.b16 %v939, %v937
        %v994 = vpack.c.b16 %v942, %v940
        %v995 = vpack.c.b16 %v943, %v941
        %v996 = vpack.c.b16 %v946, %v944
        %v997 = vpack.c.b16 %v947, %v945
        %v998 = vpack.c.b16 %v950, %v948
        %v999 = vpack.c.b16 %v951, %v949
        %v1000 = vpack.c.b16 %v954, %v952
        %v1001 = vpack.c.b16 %v955, %v953
        %v1002 = vpack.c.b16 %v958, %v956
        %v1003 = vpack.c.b16 %v959, %v957
        %v1004 = vpack.c.b16 %v962, %v960
        %v1005 = vpack.c.b16 %v963, %v961
        %v1006 = vpack.c.b16 %v966, %v964
        %v1007 = vpack.c.b16 %v967, %v965
        %v1008 = vpack.c.b16 %v970, %v968
        %v1009 = vpack.c.b16 %v971, %v969
        %v1010 = vpack.c.b16 %v974, %v972
        %v1011 = vpack.c.b16 %v975, %v973
        %v1012 = vpack.c.b16 %v978, %v976
        %v1013 = vpack.c.b16 %v979, %v977
        %v1014 = vpack.c.b16 %v982, %v980
        %v1015 = vpack.c.b16 %v983, %v981
        %1048 = vmatprep.subr.bf16.mxu0 %v999
        %1049 = vmatpush1.bf16.msra.mxu0 %v998
        %1050 = vmatprep.subr.bf16.mxu0 %v997
        %1051 = vmatpush1.bf16.msra.mxu0 %v996
        %1052 = vmatprep.subr.bf16.mxu0 %v995
        %1053 = vmatpush1.bf16.msra.mxu0 %v994
        %1054 = vmatprep.subr.bf16.mxu0 %v993
        %1055 = vmatpush1.bf16.msra.mxu0 %v992
        %1056 = vmatprep.subr.bf16.mxu0 %v991
        %1057 = vmatpush1.bf16.msra.mxu0 %v990
        %1058 = vmatprep.subr.bf16.mxu0 %v989
        %1059 = vmatpush1.bf16.msra.mxu0 %v988
        %1060 = vmatprep.subr.bf16.mxu0 %v987
        %1061 = vmatpush1.bf16.msra.mxu0 %v986
        %1062 = vmatprep.subr.bf16.mxu0 %v985
        %1063 = vmatpush1.bf16.msra.mxu0 %v984
        %1064 = vmatprep.subr.bf16.mxu0 %v1015
        %1065 = vmatpush2.bf16.msra.mxu0 %v1014
        %1066 = vmatprep.subr.bf16.mxu0 %v1013
        %1067 = vmatpush2.bf16.msra.mxu0 %v1012
        %1068 = vmatprep.subr.bf16.mxu0 %v1011
        %1069 = vmatpush2.bf16.msra.mxu0 %v1010
        %1070 = vmatprep.subr.bf16.mxu0 %v1009
        %1071 = vmatpush2.bf16.msra.mxu0 %v1008
        %1072 = vmatprep.subr.bf16.mxu0 %v1007
        %1073 = vmatpush2.bf16.msra.mxu0 %v1006
        %1074 = vmatprep.subr.bf16.mxu0 %v1005
        %1075 = vmatpush2.bf16.msra.mxu0 %v1004
        %1076 = vmatprep.subr.bf16.mxu0 %v1003
        %1077 = vmatpush2.bf16.msra.mxu0 %v1002
        %1078 = vmatprep.subr.bf16.mxu0 %v1001
        %1079 = vmatpush2.bf16.msra.mxu0 %v1000
        %1080 = vmatprep.mubr.bf16.mxu0 %v855
        %1081 = vmatmul.mubr.bf16.gmra.mxu0 %v854
        %v1082 = vpop.f32.mrf.mxu0
        %v1083 = vadd.f32 0.0, %v1082
        %v1084 = vpop.f32.mrf.mxu0
        %v1085 = vadd.f32 0.0, %v1084
        %v1086 = vpop.f32.mrf.mxu0
        %v1087 = vadd.f32 0.0, %v1086
        %v1088 = vpop.f32.mrf.mxu0
        %v1089 = vadd.f32 0.0, %v1088
        %1090 = vdwg.mxu0
        %v1091 = vadd.f32 %v850, %v1083
        %v1092 = vadd.f32 %v851, %v1085
        %v1093 = vadd.f32 %v852, %v1087
        %v1094 = vadd.f32 %v853, %v1089
        %1095 = vst [vmem:[#allocation2] sm:$0xff] %v1091
        %1096 = vst [vmem:[#allocation2 + $0x8] sm:$0xff] %v1092
        %1097 = vst [vmem:[#allocation2 + $0x10] sm:$0xff] %v1093
        %1098 = vst [vmem:[#allocation2 + $0x18] sm:$0xff] %v1094
        %p1099 = scmp.eq.s32.totalorder %s27, 2
        // Predicated region
        $region53: #{_feed_forward_impl.1} parent=35 // pred_check
          %p1100 = pneg %p1099
        $region54: #{_feed_forward_impl.1} parent=35 // pred_check_branch
          %1102 = sbr.rel (%p1100) target = $region56
        $region55: #{_feed_forward_impl.1} parent=35 // pred_region
          %v1103 = vld [vmem:[#allocation2] sm:$0xff]
          %v1104 = vld [vmem:[#allocation2 + $0x8] sm:$0xff]
          %v1105 = vld [vmem:[#allocation2 + $0x10] sm:$0xff]
          %v1106 = vld [vmem:[#allocation2 + $0x18] sm:$0xff]
          %1107 = vst [vmem:[#allocation9] sm:$0xff] %v1103
          %1108 = vst [vmem:[#allocation9 + $0x8] sm:$0xff] %v1104
          %1109 = vst [vmem:[#allocation9 + $0x10] sm:$0xff] %v1105
          %1110 = vst [vmem:[#allocation9 + $0x18] sm:$0xff] %v1106
        $region56: #{_feed_forward_impl.1} parent=35 // pred_fallthru
          _
        // Predicated region
        $region57: #{_feed_forward_impl.1} parent=35 // pred_check
          %p1111 = pneg %p156
        $region58: #{_feed_forward_impl.1} parent=35 // pred_check_branch
          %1113 = sbr.rel (%p1111) target = $region60
        $region59: #{_feed_forward_impl.1} parent=35 // pred_region
          %s1114 = smul.u32 2, %s26
          %s1116 = ssub.s32 512, 512
          %1117 = vsyncadd [#allocation5], %s1116
          %s1118 = smul.addr %s1114, 2
          %s1119 = smul.addr %s1118, 128
          %s1120 = scalar_lea.hbm %s4, %s1119
          %s1121 = sshll.u32 [#allocation9], 4
          %s1122 = int_to_ptr.vmem [resolvable:$true] %s1121
          %1127 = dma.vmem_to_hbm [thread:$0]  %s1122, 512, %s1120, [#allocation5], 256, 256, 16
        $region60: #{_feed_forward_impl.1} parent=35 // pred_fallthru
          _
        // Predicated region
        $region61: #{_feed_forward_impl.1} parent=35 // pred_check
          %p1128 = pneg %p156
        $region62: #{_feed_forward_impl.1} parent=35 // pred_check_branch
          %1130 = sbr.rel (%p1128) target = $region64
        $region63: #{_feed_forward_impl.1} parent=35 // pred_region
          %1131 = dma.done [#allocation5], 512
        $region64: #{_feed_forward_impl.1} parent=35 // pred_fallthru
          _
      $region36: #{_feed_forward_impl.1} parent=5 // pred_fallthru
        _
      %p1132 = scmp.le.s32.totalorder 2, %s17
      // Predicated region
      $region65: #{_feed_forward_impl.1} parent=5 // pred_check
        %p1133 = pneg %p1132
      $region66: #{_feed_forward_impl.1} parent=5 // pred_check_branch
        %1135 = sbr.rel (%p1133) target = $region68
      $region67: #{_feed_forward_impl.1} parent=5 // pred_region
        %s1136 = ssub.s32 %s17, 2
      $region68: #{_feed_forward_impl.1} parent=5 // pred_fallthru
        _
    $region6: #{_feed_forward_impl.1} parent=1 // loop_footer
      %s21 = sadd.s32 1, %s17
    $region7: #{_feed_forward_impl.1} parent=1 // loop_footer_branch
      %16 = sbr.rel target = $region3
    $region8: #{_feed_forward_impl.1} parent=1 // loop_exit
      _
    %1137 = vsyncpa [#allocation4], 1
    %s1138 = scalar_lea.sflag [#allocation4], 1
    %1139 = vsyncpa %s1138, 1
    %1140 = vsyncpa [#allocation7], 1
    %s1141 = scalar_lea.sflag [#allocation7], 1
    %1142 = vsyncpa %s1141, 1
    %1143 = vsyncpa [#allocation5], 1
    %s1144 = scalar_lea.sflag [#allocation5], 1
    %1145 = vsyncpa %s1144, 1

</llo_original>
